<compile_context>
chip_gen: v5e
topology: v5e:2x2
jax: 0.10.0
libtpu: 0.0.40
codegen_flags: <defaults>
</compile_context>

<pallas_src>
import jax
import jax.numpy as jnp
from jax.experimental import pallas as pl
from jax.experimental.pallas import tpu as pltpu


def _round_up(v, m):
    return ((v + m - 1) // m) * m


def _conv_matmul_kernel(w_ref, p_ref, o_ref):
    """Single fused MXU matmul covering the whole batch.

    w_ref: (8, 32)   bf16  rows = Cout(7)+pad, cols = Cin*KH*KW(27)+bias(1)+pad
    p_ref: (32, 512) bf16  rows = Cin*KH*KW(27)+ones(1)+pad, lanes = N*Ho*Wo(392)+pad
    o_ref: (8, 512)  f32   lane-dense, fully unmasked stores
    """
    o_ref[...] = jnp.dot(w_ref[...], p_ref[...],
                         preferred_element_type=jnp.float32)


def _conv_pallas(w_pad, p_pad):
    cout_pad, _ = w_pad.shape
    _, m_pad = p_pad.shape
    return pl.pallas_call(
        _conv_matmul_kernel,
        out_shape=jax.ShapeDtypeStruct((cout_pad, m_pad), jnp.float32),
        # Single invocation: full arrays, VMEM-resident, nothing to pipeline.
        in_specs=[
            pl.BlockSpec(memory_space=pltpu.MemorySpace.VMEM),
            pl.BlockSpec(memory_space=pltpu.MemorySpace.VMEM),
        ],
        out_specs=pl.BlockSpec(memory_space=pltpu.MemorySpace.VMEM),
    )(w_pad, p_pad)


def convolutional_forward(x_nchw, w_oihw, b):
    """Replicates Convolutional.forward's only defined op: conv1(X).

    x_nchw: (N, 3, H, W) f32; returns (N, 7, H-2, W-2) f32 (NCHW).
    """
    N, Cin, H, W = x_nchw.shape
    Cout, _, KH, KW = w_oihw.shape
    Ho, Wo = H - KH + 1, W - KW + 1
    KK = Cin * KH * KW          # 27
    M = N * Ho * Wo             # 392 (batch fused onto lane axis)

    KK_pad = _round_up(KK + 1, 16)     # +1 ones row for bias fold; bf16 sublane pack
    M_pad = _round_up(M, 128)          # lane multiple -> unmasked loads/stores
    Cout_pad = _round_up(Cout, 8)

    # im2col in the wrapper: 27 static slices of the 6 KB input, tap order
    # ci*KH*KW + kh*KW + kw matches w_oihw.reshape(Cout, Cin*KH*KW).
    taps = []
    for ci in range(Cin):
        for kh in range(KH):
            for kw in range(KW):
                taps.append(x_nchw[:, ci, kh:kh + Ho, kw:kw + Wo])
    patches = jnp.stack(taps, axis=0).reshape(KK, M)                  # (27, 392)
    patches = jnp.concatenate(
        [patches, jnp.ones((1, M), patches.dtype)], axis=0)           # bias row
    p_pad = jnp.pad(patches, ((0, KK_pad - KK - 1), (0, M_pad - M)))
    p_pad = p_pad.astype(jnp.bfloat16)                                # (32, 512)

    w2 = w_oihw.reshape(Cout, KK)                                     # (7, 27)
    w_aug = jnp.concatenate([w2, b.reshape(Cout, 1)], axis=1)         # bias column
    w_pad = jnp.pad(w_aug, ((0, Cout_pad - Cout), (0, KK_pad - KK - 1)))
    w_pad = w_pad.astype(jnp.bfloat16)                                # (8, 32)

    out = _conv_pallas(w_pad, p_pad)                                  # (8, 512) f32
    y = out[:Cout, :M].reshape(Cout, N, Ho, Wo)
    return jnp.transpose(y, (1, 0, 2, 3))                             # ~11 KB, trivial


if __name__ == "__main__":
    # Deterministic parameter init (PyTorch Conv2d default: U(-k, k), k=1/sqrt(fan_in)).
    Cin, Cout, K = 3, 7, 3
    key = jax.random.PRNGKey(0)
    kx, kw, kb = jax.random.split(key, 3)
    fan_in = Cin * K * K
    bound = 1.0 / (fan_in ** 0.5)
    w = jax.random.uniform(kw, (Cout, Cin, K, K), jnp.float32, -bound, bound)
    b = jax.random.uniform(kb, (Cout,), jnp.float32, -bound, bound)

    # Small deterministic input consistent with conv1: (batch=2, C=3, 16x16).
    x = jax.random.normal(kx, (2, Cin, 16, 16), jnp.float32)

    fwd = jax.jit(convolutional_forward)
    y = jax.block_until_ready(fwd(x, w, b))
    assert y.shape == (2, Cout, 14, 14), y.shape

    # Reference: XLA conv on bf16-rounded inputs (matches the kernel's operand
    # precision; accumulation is f32 in both paths), tight tolerance.
    x_bf = x.astype(jnp.bfloat16).astype(jnp.float32)
    w_bf = w.astype(jnp.bfloat16).astype(jnp.float32)
    b_bf = b.astype(jnp.bfloat16).astype(jnp.float32)
    y_ref = jax.lax.conv_general_dilated(
        x_bf, w_bf, window_strides=(1, 1), padding="VALID",
        dimension_numbers=("NCHW", "OIHW", "NCHW"),
        precision=jax.lax.Precision.HIGHEST,
    ) + b_bf.reshape(1, Cout, 1, 1)
    assert jnp.allclose(y, y_ref, atol=2e-3, rtol=2e-3), (
        float(jnp.max(jnp.abs(y - y_ref))))

    # TODO(synk): pool/conv2/fc1/fc2/fc3 are None and forward() raises
    # NotImplementedError in the source module, so only conv1 is implemented.
    print("KERNEL_OK")
</pallas_src>

<mosaic_0001>
module attributes {stable_mosaic.version = 11 : i64} {
  func.func @_conv_matmul_kernel(%arg0: memref<8x32xbf16, #tpu.memory_space<vmem>>, %arg1: memref<32x512xbf16, #tpu.memory_space<vmem>>, %arg2: memref<8x512xf32, #tpu.memory_space<vmem>>) attributes {dimension_semantics = [], scalar_prefetch = 0 : i64, scratch_operands = 0 : i64, tpu.core_type = #tpu.core_type<tc>} {
    %c0 = arith.constant 0 : index
    %c0_0 = arith.constant 0 : index
    %0 = vector.load %arg0[%c0, %c0_0] : memref<8x32xbf16, #tpu.memory_space<vmem>>, vector<8x32xbf16>
    %c0_1 = arith.constant 0 : index
    %c0_2 = arith.constant 0 : index
    %1 = vector.load %arg1[%c0_1, %c0_2] : memref<32x512xbf16, #tpu.memory_space<vmem>>, vector<32x512xbf16>
    %cst = arith.constant dense<0.000000e+00> : vector<8x512xf32>
    %2 = tpu.matmul %0, %1, %cst {dimension_numbers = #tpu.dot_dimension_numbers<[1], [0], [0], [1], [0, 0, 1, 1], [], []>} : vector<8x32xbf16>, vector<32x512xbf16>, vector<8x512xf32> -> vector<8x512xf32>
    %c0_3 = arith.constant 0 : index
    %c0_4 = arith.constant 0 : index
    %3 = vector.load %arg2[%c0_3, %c0_4] : memref<8x512xf32, #tpu.memory_space<vmem>>, vector<8x512xf32>
    tpu.vector_store %arg2[%c0_3, %c0_4], %2 {strides = array<i32>} : memref<8x512xf32, #tpu.memory_space<vmem>>, vector<8x512xf32>,
    return
  }
}

</mosaic_0001>

<llo_original>
// kernel: convolutional_forward.1
$region0: #{convolutional_forward.1}
  #allocation0 [shape = 'u32[]', space=smem, size = 0x4, offset = 0x4, fixed_abs, tag = 'smem constant byte address 0x4 - core index']
  #allocation1 [shape = 'u32[72,128]{1,0:T(1,128)}', space=vmem, size = 0x9000, scoped, tag = 'internal scratch']
  %s0 = inlined_call_operand.vmem [shape: bf16[8,32], index: 0, kind: input, shape index: {}]
  %s1 = inlined_call_operand.vmem [shape: bf16[32,512], index: 1, kind: input, shape index: {}]
  %s2 = inlined_call_operand.vmem [shape: f32[8,512], index: 2, kind: output, shape index: {}]
  %s3 = sld [smem:[#allocation0]]
  $region18: #{convolutional_forward.1} parent=0
    _
  %s5 = ssub.s32 1, %s3
  %s6 = scalar_select 0, %s5, %s3
  // Predicated region
  $region2: #{convolutional_forward.1} parent=0 // pred_check
    _
  $region3: #{convolutional_forward.1} parent=0 // pred_check_branch
    %8 = sbr.rel (0) target = $region5
  $region4: #{convolutional_forward.1} parent=0 // pred_region
    _
  $region5: #{convolutional_forward.1} parent=0 // pred_fallthru
    _
  // Predicated region
  $region6: #{convolutional_forward.1} parent=0 // pred_check
    _
  $region7: #{convolutional_forward.1} parent=0 // pred_check_branch
    %10 = sbr.rel (0) target = $region9
  $region8: #{convolutional_forward.1} parent=0 // pred_region
    _
  $region9: #{convolutional_forward.1} parent=0 // pred_fallthru
    _
  %v12 = vld [vmem:[%s0] sm:$0xf]
  %v13 = vld [vmem:[%s1] sm:$0xff]
  %v14 = vld [vmem:[%s1 + $0x8] sm:$0xff]
  %v15 = vld [vmem:[%s1 + $0x10] sm:$0xff]
  %v16 = vld [vmem:[%s1 + $0x18] sm:$0xff]
  %v17 = vld [vmem:[%s1 + $0x20] sm:$0xff]
  %v18 = vld [vmem:[%s1 + $0x28] sm:$0xff]
  %v19 = vld [vmem:[%s1 + $0x30] sm:$0xff]
  %v20 = vld [vmem:[%s1 + $0x38] sm:$0xff]
  %v29 = vunpack.c.l.b16 %v13
  %v30 = vunpack.c.h.b16 %v13
  %v31 = vunpack.c.l.b16 %v14
  %v32 = vunpack.c.h.b16 %v14
  %v33 = vunpack.c.l.b16 %v15
  %v34 = vunpack.c.h.b16 %v15
  %v35 = vunpack.c.l.b16 %v16
  %v36 = vunpack.c.h.b16 %v16
  %v37 = vunpack.c.l.b16 %v17
  %v38 = vunpack.c.h.b16 %v17
  %v39 = vunpack.c.l.b16 %v18
  %v40 = vunpack.c.h.b16 %v18
  %v41 = vunpack.c.l.b16 %v19
  %v42 = vunpack.c.h.b16 %v19
  %v43 = vunpack.c.l.b16 %v20
  %v44 = vunpack.c.h.b16 %v20
  %v45 = vpack.c.b16 %v33, %v29
  %v46 = vpack.c.b16 %v34, %v30
  %v47 = vpack.c.b16 %v35, %v31
  %v48 = vpack.c.b16 %v36, %v32
  %v49 = vpack.c.b16 %v41, %v37
  %v50 = vpack.c.b16 %v42, %v38
  %v51 = vpack.c.b16 %v43, %v39
  %v52 = vpack.c.b16 %v44, %v40
  %vm61 = vcmask 261120
  %v63 = vsel %vm61, %v12, 0
  %65 = vmatpush.bf16.msra.mxu0 0
  %66 = vmatpush.bf16.msra.mxu0 0
  %67 = vmatpush.bf16.msra.mxu0 0
  %68 = vmatpush.bf16.msra.mxu0 0
  %69 = vmatpush.bf16.msra.mxu0 0
  %70 = vmatpush.bf16.msra.mxu0 0
  %71 = vmatpush.bf16.msra.mxu0 %v49
  %72 = vmatpush.bf16.msra.mxu0 %v45
  %73 = vmatmul.bf16.gmra.mxu0 %v63
  %v74 = vpop.f32.mrf.mxu0
  %v75 = vadd.f32 0.0, %v74
  %v76 = vpop.f32.mrf.mxu0
  %77 = vdwg.mxu0
  %78 = vmatpush.bf16.msra.mxu0 0
  %79 = vmatpush.bf16.msra.mxu0 0
  %80 = vmatpush.bf16.msra.mxu0 0
  %81 = vmatpush.bf16.msra.mxu0 0
  %82 = vmatpush.bf16.msra.mxu0 0
  %83 = vmatpush.bf16.msra.mxu0 0
  %84 = vmatpush.bf16.msra.mxu0 %v50
  %85 = vmatpush.bf16.msra.mxu0 %v46
  %86 = vmatmul.bf16.gmra.mxu0 %v63
  %v87 = vpop.f32.mrf.mxu0
  %v88 = vadd.f32 0.0, %v87
  %v89 = vpop.f32.mrf.mxu0
  %90 = vdwg.mxu0
  %91 = vmatpush.bf16.msra.mxu0 0
  %92 = vmatpush.bf16.msra.mxu0 0
  %93 = vmatpush.bf16.msra.mxu0 0
  %94 = vmatpush.bf16.msra.mxu0 0
  %95 = vmatpush.bf16.msra.mxu0 0
  %96 = vmatpush.bf16.msra.mxu0 0
  %97 = vmatpush.bf16.msra.mxu0 %v51
  %98 = vmatpush.bf16.msra.mxu0 %v47
  %99 = vmatmul.bf16.gmra.mxu0 %v63
  %v100 = vpop.f32.mrf.mxu0
  %v101 = vadd.f32 0.0, %v100
  %v102 = vpop.f32.mrf.mxu0
  %103 = vdwg.mxu0
  %104 = vmatpush.bf16.msra.mxu0 0
  %105 = vmatpush.bf16.msra.mxu0 0
  %106 = vmatpush.bf16.msra.mxu0 0
  %107 = vmatpush.bf16.msra.mxu0 0
  %108 = vmatpush.bf16.msra.mxu0 0
  %109 = vmatpush.bf16.msra.mxu0 0
  %110 = vmatpush.bf16.msra.mxu0 %v52
  %111 = vmatpush.bf16.msra.mxu0 %v48
  %112 = vmatmul.bf16.gmra.mxu0 %v63
  %v113 = vpop.f32.mrf.mxu0
  %v114 = vadd.f32 0.0, %v113
  %v115 = vpop.f32.mrf.mxu0
  %116 = vdwg.mxu0
  %117 = vst [vmem:[%s2] sm:$0xff] %v75
  %118 = vst [vmem:[%s2 + $0x8] sm:$0xff] %v88
  %119 = vst [vmem:[%s2 + $0x10] sm:$0xff] %v101
  %120 = vst [vmem:[%s2 + $0x18] sm:$0xff] %v114
  // Predicated region
  $region10: #{convolutional_forward.1} parent=0 // pred_check
    _
  $region11: #{convolutional_forward.1} parent=0 // pred_check_branch
    %122 = sbr.rel (0) target = $region13
  $region12: #{convolutional_forward.1} parent=0 // pred_region
    _
  $region13: #{convolutional_forward.1} parent=0 // pred_fallthru
    _
  // Predicated region
  $region14: #{convolutional_forward.1} parent=0 // pred_check
    _
  $region15: #{convolutional_forward.1} parent=0 // pred_check_branch
    %124 = sbr.rel (0) target = $region17
  $region16: #{convolutional_forward.1} parent=0 // pred_region
    _
  $region17: #{convolutional_forward.1} parent=0 // pred_fallthru
    _

</llo_original>
